<compile_context>
chip_gen: v7x
topology: tpu7x:2x2x1
jax: 0.10.0
libtpu: 0.0.40
codegen_flags: <defaults>
</compile_context>

<pallas_src>
import jax
import jax.numpy as jnp
from jax.experimental import pallas as pl
from jax.experimental.pallas import tpu as pltpu


def _softplus(x):
    # matches torch.nn.Softplus(beta=1, threshold=20)
    return jnp.where(x > 20.0, x, jnp.log1p(jnp.exp(jnp.minimum(x, 20.0))))


def _round_up(x, m):
    return ((x + m - 1) // m) * m


def _perhubimed_kernel(hid_ref,                       # [Bt, D]  bf16
                       ann_ref,                       # [Bt, H]  f32 (softplus'd annotator path)
                       w_pool_ref, b_pool_ref,        # [D, D] bf16, [1, D] f32
                       w_fc1_ref, b_fc1_ref,          # [D, H] bf16, [1, H] f32
                       w_fc2_ref, b_fc2_ref,          # [H, OP] bf16, [1, OP] f32
                       out_ref):                      # [Bt, OP] f32
    # --- pooler: Linear(D, D) + ReLU (dropout(0.1) identity in eval) ---
    pooled = jnp.dot(hid_ref[...], w_pool_ref[...],
                     preferred_element_type=jnp.float32) + b_pool_ref[...]
    pooled = jnp.maximum(pooled, 0.0)

    # --- fc1 + softplus ---
    x = jnp.dot(pooled.astype(jnp.bfloat16), w_fc1_ref[...],
                preferred_element_type=jnp.float32) + b_fc1_ref[...]
    x = _softplus(x)                                                    # [Bt, H]

    # --- fc2(x * annotator_act), lane-dense [Bt, OP] store ---
    xa = (x * ann_ref[...]).astype(jnp.bfloat16)
    out_ref[...] = jnp.dot(xa, w_fc2_ref[...],
                           preferred_element_type=jnp.float32) + b_fc2_ref[...]


def perhubimed_forward(hidden_cls, annotator_ids, tokens, params, *,
                       max_batch_tile=256):
    """hidden_cls: [B, D] f32 (BERT CLS hidden state), annotator_ids: [B] i32,
    tokens: [B, T] i32.  Returns [B, output_dim] f32."""
    B, D = hidden_cls.shape
    H = params["w_fc1"].shape[1]
    out_dim = params["word_table"].shape[1]

    f32, bf16, i32 = jnp.float32, jnp.bfloat16, jnp.int32

    # --- batch tile: multiple of 16 (bf16 sublane pack); cap at max_batch_tile;
    #     for large batches keep >=2 grid steps so v7x megacore can shard ---
    B16 = _round_up(B, 16)
    Bt = min(max_batch_tile, max(16, _round_up((B16 + 1) // 2, 16)))
    B_pad = _round_up(B, Bt)
    OP = _round_up(max(out_dim, 128), 128)   # lane-dense output slab

    annotator_ids = annotator_ids.astype(i32)
    tokens = tokens.astype(i32)

    # --- wrapper-side annotator path: gather + fc_annotator + softplus, [B, H].
    #     (dropout on annotator embeddings is eval-mode identity) ---
    ann = _softplus(
        jnp.dot(params["ann_table"][annotator_ids], params["w_fca"],
                preferred_element_type=f32) + params["b_fca"])

    # --- wrapper-side word-bias embedding-bag, [B, out_dim] ---
    wb = params["word_table"][tokens]                       # [B, T, out_dim]
    wb = (wb * (tokens != 0)[:, :, None].astype(f32)).sum(axis=1)

    # --- batch padding (padded rows sliced off at the end) ---
    hid_b = jnp.zeros((B_pad, D), bf16).at[:B].set(hidden_cls.astype(bf16))
    ann_b = jnp.zeros((B_pad, H), f32).at[:B].set(ann.astype(f32))

    # --- lane-dense zero padding of the output_dim axis for fc2 ---
    w_fc2 = jnp.zeros((H, OP), f32).at[:, :out_dim].set(params["w_fc2"]).astype(bf16)
    b_fc2 = jnp.zeros((1, OP), f32).at[:, :out_dim].set(params["b_fc2"])

    w_pool = params["w_pool"].astype(bf16)
    w_fc1 = params["w_fc1"].astype(bf16)
    b_pool = params["b_pool"].astype(f32)
    b_fc1 = params["b_fc1"].astype(f32)

    row_map = lambda i: (i, 0)       # batch-tiled arrays
    fixed_map = lambda i: (0, 0)     # VMEM-resident weights

    grid = (B_pad // Bt,)
    grid_spec = pltpu.PrefetchScalarGridSpec(
        num_scalar_prefetch=0,
        grid=grid,
        in_specs=[
            pl.BlockSpec((Bt, D), row_map),      # hidden_cls tile (bf16)
            pl.BlockSpec((Bt, H), row_map),      # annotator activation tile
            pl.BlockSpec((D, D), fixed_map),     # w_pool
            pl.BlockSpec((1, D), fixed_map),     # b_pool
            pl.BlockSpec((D, H), fixed_map),     # w_fc1
            pl.BlockSpec((1, H), fixed_map),     # b_fc1
            pl.BlockSpec((H, OP), fixed_map),    # w_fc2 (lane-padded)
            pl.BlockSpec((1, OP), fixed_map),    # b_fc2 (lane-padded)
        ],
        out_specs=pl.BlockSpec((Bt, OP), row_map),
    )

    operands = (hid_b, ann_b, w_pool, b_pool, w_fc1, b_fc1, w_fc2, b_fc2)

    flops = 2 * B_pad * (D * D + D * H + H * OP)
    transcendentals = 2 * B_pad * H
    bytes_accessed = sum(int(a.size) * a.dtype.itemsize for a in operands) \
        + B_pad * OP * 4

    out = pl.pallas_call(
        _perhubimed_kernel,
        out_shape=jax.ShapeDtypeStruct((B_pad, OP), f32),
        grid_spec=grid_spec,
        compiler_params=pltpu.CompilerParams(
            dimension_semantics=("parallel",),
            vmem_limit_bytes=32 * 1024 * 1024),
        cost_estimate=pl.CostEstimate(flops=flops,
                                      transcendentals=transcendentals,
                                      bytes_accessed=bytes_accessed),
    )(*operands)

    return out[:B, :out_dim] + wb


def _reference(hidden_cls, annotator_ids, tokens, params):
    # pure-JAX reference; mimics the kernel's bf16 MXU inputs (f32 accumulation)
    r = lambda a: a.astype(jnp.bfloat16).astype(jnp.float32)
    pooled = jnp.maximum(r(hidden_cls) @ r(params["w_pool"]) + params["b_pool"], 0.0)
    x = _softplus(r(pooled) @ r(params["w_fc1"]) + params["b_fc1"])
    ann = _softplus(params["ann_table"][annotator_ids] @ params["w_fca"]
                    + params["b_fca"])
    wb = params["word_table"][tokens]
    wb = (wb * (tokens != 0)[:, :, None]).sum(axis=1)
    return r(x * ann) @ r(params["w_fc2"]) + params["b_fc2"] + wb


def make_params(key, *, text_dim, hidden_dim, cls_emb_dim, out_dim,
                annotator_num, word_num):
    ks = jax.random.split(key, 10)
    u = lambda k, shape, s: jax.random.uniform(k, shape, jnp.float32, -s, s)
    return {
        # nn.Embedding tables: .data.uniform_(-0.01, 0.01) overwrites padding row
        "ann_table":  u(ks[0], (annotator_num, cls_emb_dim), 0.01),
        "word_table": u(ks[1], (word_num, out_dim), 0.01),
        # nn.Linear weights stored pre-transposed as [in, out]
        "w_pool": u(ks[2], (text_dim, text_dim), 1.0 / (text_dim ** 0.5)),
        "b_pool": u(ks[3], (1, text_dim),        1.0 / (text_dim ** 0.5)),
        "w_fc1":  u(ks[4], (text_dim, hidden_dim), 1.0 / (text_dim ** 0.5)),
        "b_fc1":  u(ks[5], (1, hidden_dim),        1.0 / (text_dim ** 0.5)),
        "w_fca":  u(ks[6], (cls_emb_dim, hidden_dim), 1.0 / (cls_emb_dim ** 0.5)),
        "b_fca":  u(ks[7], (1, hidden_dim),           1.0 / (cls_emb_dim ** 0.5)),
        "w_fc2":  u(ks[8], (hidden_dim, out_dim), 1.0 / (hidden_dim ** 0.5)),
        "b_fc2":  u(ks[9], (1, out_dim),          1.0 / (hidden_dim ** 0.5)),
    }


if __name__ == "__main__":
    # Small shapes consistent with the module (synthetic text_embedding_dim).
    B, T = 4, 8                 # batch, token sequence length
    TEXT_DIM = 64               # stand-in for EMBEDDINGS_SIZES['distilbert'] (=768)
    HIDDEN_DIM = 32
    CLS_EMB_DIM = 20            # classifier_embedding_dim
    OUT_DIM = 2                 # output_dim
    ANNOTATOR_NUM = 16
    WORD_NUM = 64

    key = jax.random.PRNGKey(0)
    k_p, k_h, k_a, k_t = jax.random.split(key, 4)

    params = make_params(k_p, text_dim=TEXT_DIM, hidden_dim=HIDDEN_DIM,
                         cls_emb_dim=CLS_EMB_DIM, out_dim=OUT_DIM,
                         annotator_num=ANNOTATOR_NUM, word_num=WORD_NUM)

    # Synthetic BERT CLS hidden state (hidden_state[:, 0] of the encoder).
    hidden_cls = jax.random.normal(k_h, (B, TEXT_DIM), jnp.float32)
    annotator_ids = jax.random.randint(k_a, (B,), 0, ANNOTATOR_NUM, jnp.int32)
    # tokens_sorted: 0 is the padding id; force some padding to exercise the mask.
    tokens = jax.random.randint(k_t, (B, T), 0, WORD_NUM, jnp.int32)
    tokens = tokens.at[:, -2:].set(0)

    out = perhubimed_forward(hidden_cls, annotator_ids, tokens, params)
    out = jax.block_until_ready(out)

    ref = _reference(hidden_cls, annotator_ids, tokens, params)
    assert out.shape == (B, OUT_DIM), out.shape
    assert jnp.allclose(out, ref, atol=2e-3, rtol=2e-3), (out, ref)

    print("KERNEL_OK")
</pallas_src>

<mosaic_0001>
module attributes {stable_mosaic.version = 11 : i64} {
  func.func @_perhubimed_kernel(%arg0: i32, %arg1: memref<16x64xbf16, #tpu.memory_space<vmem>>, %arg2: memref<16x32xf32, #tpu.memory_space<vmem>>, %arg3: memref<64x64xbf16, #tpu.memory_space<vmem>>, %arg4: memref<1x64xf32, #tpu.memory_space<vmem>>, %arg5: memref<64x32xbf16, #tpu.memory_space<vmem>>, %arg6: memref<1x32xf32, #tpu.memory_space<vmem>>, %arg7: memref<32x128xbf16, #tpu.memory_space<vmem>>, %arg8: memref<1x128xf32, #tpu.memory_space<vmem>>, %arg9: memref<16x128xf32, #tpu.memory_space<vmem>>) attributes {dimension_semantics = [#tpu.dimension_semantics<parallel>], iteration_bounds = array<i64: 1>, scalar_prefetch = 0 : i64, scratch_operands = 0 : i64, tpu.core_type = #tpu.core_type<tc>, window_params = [{transform_indices = @transform_0, window_bounds = array<i64: 16, 64>}, {transform_indices = @transform_1, window_bounds = array<i64: 16, 32>}, {pipeline_mode = #tpu.pipeline_mode<synchronous>, transform_indices = @transform_2, window_bounds = array<i64: 64, 64>}, {pipeline_mode = #tpu.pipeline_mode<synchronous>, transform_indices = @transform_3, window_bounds = array<i64: 1, 64>}, {pipeline_mode = #tpu.pipeline_mode<synchronous>, transform_indices = @transform_4, window_bounds = array<i64: 64, 32>}, {pipeline_mode = #tpu.pipeline_mode<synchronous>, transform_indices = @transform_5, window_bounds = array<i64: 1, 32>}, {pipeline_mode = #tpu.pipeline_mode<synchronous>, transform_indices = @transform_6, window_bounds = array<i64: 32, 128>}, {pipeline_mode = #tpu.pipeline_mode<synchronous>, transform_indices = @transform_7, window_bounds = array<i64: 1, 128>}, {transform_indices = @transform_8, window_bounds = array<i64: 16, 128>}]} {
    %c0 = arith.constant 0 : index
    %c0_0 = arith.constant 0 : index
    %0 = vector.load %arg1[%c0, %c0_0] : memref<16x64xbf16, #tpu.memory_space<vmem>>, vector<16x64xbf16>
    %c0_1 = arith.constant 0 : index
    %c0_2 = arith.constant 0 : index
    %1 = vector.load %arg3[%c0_1, %c0_2] : memref<64x64xbf16, #tpu.memory_space<vmem>>, vector<64x64xbf16>
    %cst = arith.constant dense<0.000000e+00> : vector<16x64xf32>
    %2 = tpu.matmul %0, %1, %cst {dimension_numbers = #tpu.dot_dimension_numbers<[1], [0], [0], [1], [0, 0, 1, 1], [], []>} : vector<16x64xbf16>, vector<64x64xbf16>, vector<16x64xf32> -> vector<16x64xf32>
    %c0_3 = arith.constant 0 : index
    %c0_4 = arith.constant 0 : index
    %3 = vector.load %arg4[%c0_3, %c0_4] : memref<1x64xf32, #tpu.memory_space<vmem>>, vector<1x64xf32>
    %4 = vector.broadcast %3 : vector<1x64xf32> to vector<16x64xf32>
    %5 = arith.addf %2, %4 : vector<16x64xf32>
    %cst_5 = arith.constant 0.000000e+00 : f32
    %6 = vector.broadcast %cst_5 : f32 to vector<16x64xf32>
    %7 = arith.maximumf %5, %6 : vector<16x64xf32>
    %8 = arith.truncf %7 : vector<16x64xf32> to vector<16x64xbf16>
    %c0_6 = arith.constant 0 : index
    %c0_7 = arith.constant 0 : index
    %9 = vector.load %arg5[%c0_6, %c0_7] : memref<64x32xbf16, #tpu.memory_space<vmem>>, vector<64x32xbf16>
    %cst_8 = arith.constant dense<0.000000e+00> : vector<16x32xf32>
    %10 = tpu.matmul %8, %9, %cst_8 {dimension_numbers = #tpu.dot_dimension_numbers<[1], [0], [0], [1], [0, 0, 1, 1], [], []>} : vector<16x64xbf16>, vector<64x32xbf16>, vector<16x32xf32> -> vector<16x32xf32>
    %c0_9 = arith.constant 0 : index
    %c0_10 = arith.constant 0 : index
    %11 = vector.load %arg6[%c0_9, %c0_10] : memref<1x32xf32, #tpu.memory_space<vmem>>, vector<1x32xf32>
    %12 = vector.broadcast %11 : vector<1x32xf32> to vector<16x32xf32>
    %13 = arith.addf %10, %12 : vector<16x32xf32>
    %cst_11 = arith.constant 2.000000e+01 : f32
    %14 = vector.broadcast %cst_11 : f32 to vector<16x32xf32>
    %15 = arith.cmpf ogt, %13, %14 : vector<16x32xf32>
    %cst_12 = arith.constant 2.000000e+01 : f32
    %16 = vector.broadcast %cst_12 : f32 to vector<16x32xf32>
    %17 = arith.minimumf %13, %16 : vector<16x32xf32>
    %18 = math.exp %17 : vector<16x32xf32>
    %19 = math.log1p %18 : vector<16x32xf32>
    %20 = arith.select %15, %13, %19 : vector<16x32xi1>, vector<16x32xf32>
    %c0_13 = arith.constant 0 : index
    %c0_14 = arith.constant 0 : index
    %21 = vector.load %arg2[%c0_13, %c0_14] : memref<16x32xf32, #tpu.memory_space<vmem>>, vector<16x32xf32>
    %22 = arith.mulf %20, %21 : vector<16x32xf32>
    %23 = arith.truncf %22 : vector<16x32xf32> to vector<16x32xbf16>
    %c0_15 = arith.constant 0 : index
    %c0_16 = arith.constant 0 : index
    %24 = vector.load %arg7[%c0_15, %c0_16] : memref<32x128xbf16, #tpu.memory_space<vmem>>, vector<32x128xbf16>
    %cst_17 = arith.constant dense<0.000000e+00> : vector<16x128xf32>
    %25 = tpu.matmul %23, %24, %cst_17 {dimension_numbers = #tpu.dot_dimension_numbers<[1], [0], [0], [1], [0, 0, 1, 1], [], []>} : vector<16x32xbf16>, vector<32x128xbf16>, vector<16x128xf32> -> vector<16x128xf32>
    %c0_18 = arith.constant 0 : index
    %c0_19 = arith.constant 0 : index
    %26 = vector.load %arg8[%c0_18, %c0_19] : memref<1x128xf32, #tpu.memory_space<vmem>>, vector<1x128xf32>
    %27 = vector.broadcast %26 : vector<1x128xf32> to vector<16x128xf32>
    %28 = arith.addf %25, %27 : vector<16x128xf32>
    %c0_20 = arith.constant 0 : index
    %c0_21 = arith.constant 0 : index
    %29 = vector.load %arg9[%c0_20, %c0_21] : memref<16x128xf32, #tpu.memory_space<vmem>>, vector<16x128xf32>
    tpu.vector_store %arg9[%c0_20, %c0_21], %28 {strides = array<i32>} : memref<16x128xf32, #tpu.memory_space<vmem>>, vector<16x128xf32>,
    return
  }
  func.func @transform_0(%arg0: i32) -> (i32, i32) {
    %c0_i32 = arith.constant 0 : i32
    %c0_i32_0 = arith.constant 0 : i32
    return %arg0, %c0_i32 : i32, i32
  }
  func.func @transform_1(%arg0: i32) -> (i32, i32) {
    %c0_i32 = arith.constant 0 : i32
    %c0_i32_0 = arith.constant 0 : i32
    return %arg0, %c0_i32 : i32, i32
  }
  func.func @transform_2(%arg0: i32) -> (i32, i32) {
    %c0_i32 = arith.constant 0 : i32
    %c0_i32_0 = arith.constant 0 : i32
    %c0_i32_1 = arith.constant 0 : i32
    return %c0_i32, %c0_i32_0 : i32, i32
  }
  func.func @transform_3(%arg0: i32) -> (i32, i32) {
    %c0_i32 = arith.constant 0 : i32
    %c0_i32_0 = arith.constant 0 : i32
    %c0_i32_1 = arith.constant 0 : i32
    return %c0_i32, %c0_i32_0 : i32, i32
  }
  func.func @transform_4(%arg0: i32) -> (i32, i32) {
    %c0_i32 = arith.constant 0 : i32
    %c0_i32_0 = arith.constant 0 : i32
    %c0_i32_1 = arith.constant 0 : i32
    return %c0_i32, %c0_i32_0 : i32, i32
  }
  func.func @transform_5(%arg0: i32) -> (i32, i32) {
    %c0_i32 = arith.constant 0 : i32
    %c0_i32_0 = arith.constant 0 : i32
    %c0_i32_1 = arith.constant 0 : i32
    return %c0_i32, %c0_i32_0 : i32, i32
  }
  func.func @transform_6(%arg0: i32) -> (i32, i32) {
    %c0_i32 = arith.constant 0 : i32
    %c0_i32_0 = arith.constant 0 : i32
    %c0_i32_1 = arith.constant 0 : i32
    return %c0_i32, %c0_i32_0 : i32, i32
  }
  func.func @transform_7(%arg0: i32) -> (i32, i32) {
    %c0_i32 = arith.constant 0 : i32
    %c0_i32_0 = arith.constant 0 : i32
    %c0_i32_1 = arith.constant 0 : i32
    return %c0_i32, %c0_i32_0 : i32, i32
  }
  func.func @transform_8(%arg0: i32) -> (i32, i32) {
    %c0_i32 = arith.constant 0 : i32
    %c0_i32_0 = arith.constant 0 : i32
    return %arg0, %c0_i32 : i32, i32
  }
}

</mosaic_0001>

<llo_original>
// kernel: tpu_custom_call.1
$region0: #{tpu_custom_call.1}
  #allocation0 [shape = 'u32[]', space=smem, size = 0x4, offset = 0x4, fixed_abs, tag = 'smem constant byte address 0x4 - core index']
  #allocation1 [shape = 'u32[144,128]{1,0:T(1,128)}', space=vmem, size = 0x12000, scoped, tag = 'internal scratch']
  %s0 = inlined_call_operand.hbm [shape: bf16[16,64], index: 0, kind: input, shape index: {}]
  %s1 = inlined_call_operand.vmem [shape: f32[16,32], index: 1, kind: input, shape index: {}]
  %s2 = inlined_call_operand.vmem [shape: bf16[64,64], index: 2, kind: input, shape index: {}]
  %s3 = inlined_call_operand.vmem [shape: f32[1,64], index: 3, kind: input, shape index: {}]
  %s4 = inlined_call_operand.vmem [shape: bf16[64,32], index: 4, kind: input, shape index: {}]
  %s5 = inlined_call_operand.vmem [shape: f32[1,32], index: 5, kind: input, shape index: {}]
  %s6 = inlined_call_operand.vmem [shape: bf16[32,128], index: 6, kind: input, shape index: {}]
  %s7 = inlined_call_operand.vmem [shape: f32[1,128], index: 7, kind: input, shape index: {}]
  %s8 = inlined_call_operand.hbm [shape: f32[16,128], index: 8, kind: output, shape index: {}]
  %s9 = sld [smem:[#allocation0]]
  $region46: #{tpu_custom_call.1} parent=0
    _
  %s11 = ssub.s32 1, %s9
  %s12 = scalar_select 0, %s11, %s9
  $region1: #{tpu_custom_call.1} parent=0
    #allocation2 [shape = 'u8[4096]{0}', space=vmem, size = 0x1000, scoped, tag = 'input window, operand 0, single buffered']
    #allocation3 [shape = 's32[1]{0}', space=sflag, size = 0x4, scoped, tag = 'scoped memory for tpu_custom_call.1']
    #allocation4 [shape = 's32[1]{0}', space=sflag, size = 0x4, scoped, tag = 'scoped memory for tpu_custom_call.1']
    #allocation5 [shape = 'u8[8192]{0}', space=vmem, size = 0x2000, scoped, tag = 'output window, operand 0, single buffered']
    %13 = vsyncpa [#allocation3], 0
    %14 = vsyncpa [#allocation4], 0
    // Predicated region
    $region2: #{tpu_custom_call.1} parent=1 // pred_check
      _
    $region3: #{tpu_custom_call.1} parent=1 // pred_check_branch
      %16 = sbr.rel (0) target = $region5
    $region4: #{tpu_custom_call.1} parent=1 // pred_region
      %s18 = ssub.s32 128, 128
      %19 = vsyncadd [#allocation3], %s18
      %s20 = sshll.u32 [#allocation2], 4
      %s21 = int_to_ptr.vmem [resolvable:$true] %s20
      %26 = dma.hbm_to_vmem [thread:$0]  %s0, 128, %s21, [#allocation3], 64, 64, 4
    $region5: #{tpu_custom_call.1} parent=1 // pred_fallthru
      _
    // Predicated region
    $region6: #{tpu_custom_call.1} parent=1 // pred_check
      _
    $region7: #{tpu_custom_call.1} parent=1 // pred_check_branch
      %28 = sbr.rel (0) target = $region9
    $region8: #{tpu_custom_call.1} parent=1 // pred_region
      _
    $region9: #{tpu_custom_call.1} parent=1 // pred_fallthru
      _
    // Predicated region
    $region10: #{tpu_custom_call.1} parent=1 // pred_check
      _
    $region11: #{tpu_custom_call.1} parent=1 // pred_check_branch
      %30 = sbr.rel (0) target = $region13
    $region12: #{tpu_custom_call.1} parent=1 // pred_region
      _
    $region13: #{tpu_custom_call.1} parent=1 // pred_fallthru
      _
    // Predicated region
    $region14: #{tpu_custom_call.1} parent=1 // pred_check
      _
    $region15: #{tpu_custom_call.1} parent=1 // pred_check_branch
      %32 = sbr.rel (0) target = $region17
    $region16: #{tpu_custom_call.1} parent=1 // pred_region
      _
    $region17: #{tpu_custom_call.1} parent=1 // pred_fallthru
      _
    // Predicated region
    $region18: #{tpu_custom_call.1} parent=1 // pred_check
      _
    $region19: #{tpu_custom_call.1} parent=1 // pred_check_branch
      %34 = sbr.rel (0) target = $region21
    $region20: #{tpu_custom_call.1} parent=1 // pred_region
      _
    $region21: #{tpu_custom_call.1} parent=1 // pred_fallthru
      _
    // Predicated region
    $region22: #{tpu_custom_call.1} parent=1 // pred_check
      _
    $region23: #{tpu_custom_call.1} parent=1 // pred_check_branch
      %36 = sbr.rel (0) target = $region25
    $region24: #{tpu_custom_call.1} parent=1 // pred_region
      _
    $region25: #{tpu_custom_call.1} parent=1 // pred_fallthru
      _
    // Predicated region
    $region26: #{tpu_custom_call.1} parent=1 // pred_check
      _
    $region27: #{tpu_custom_call.1} parent=1 // pred_check_branch
      %38 = sbr.rel (0) target = $region29
    $region28: #{tpu_custom_call.1} parent=1 // pred_region
      _
    $region29: #{tpu_custom_call.1} parent=1 // pred_fallthru
      _
    // Predicated region
    $region30: #{tpu_custom_call.1} parent=1 // pred_check
      _
    $region31: #{tpu_custom_call.1} parent=1 // pred_check_branch
      %40 = sbr.rel (0) target = $region33
    $region32: #{tpu_custom_call.1} parent=1 // pred_region
      _
    $region33: #{tpu_custom_call.1} parent=1 // pred_fallthru
      _
    // Predicated region
    $region34: #{tpu_custom_call.1} parent=1 // pred_check
      _
    $region35: #{tpu_custom_call.1} parent=1 // pred_check_branch
      %42 = sbr.rel (0) target = $region37
    $region36: #{tpu_custom_call.1} parent=1 // pred_region
      %43 = dma.done [#allocation3], 128
    $region37: #{tpu_custom_call.1} parent=1 // pred_fallthru
      _
    %v45 = vld [vmem:[#allocation2] sm:$0xf]
    %v46 = vld [vmem:[#allocation2 + $0x4] sm:$0xf]
    %v47 = vld [vmem:[%s2] sm:$0xf]
    %v48 = vld [vmem:[%s2 + $0x4] sm:$0xf]
    %v49 = vld [vmem:[%s2 + $0x8] sm:$0xf]
    %v50 = vld [vmem:[%s2 + $0xc] sm:$0xf]
    %v51 = vld [vmem:[%s2 + $0x10] sm:$0xf]
    %v52 = vld [vmem:[%s2 + $0x14] sm:$0xf]
    %v53 = vld [vmem:[%s2 + $0x18] sm:$0xf]
    %v54 = vld [vmem:[%s2 + $0x1c] sm:$0xf]
    %v55 = vld [vmem:[%s3] sm:$0x1]
    %v57 = vlaneseq
    %v58 = vshrl.u32 %v57, 7
    %v59 = vsub.s32 0, %v58
    %v60 = vrot.slane %v55, %v59
    %v64 = vunpack.c.l.b16 %v45
    %v65 = vunpack.c.l.b16 %v46
    %v66 = vpack.c.b16 %v65, %v64
    %v75 = vunpack.c.l.b16 %v47
    %v76 = vunpack.c.l.b16 %v48
    %v77 = vunpack.c.l.b16 %v49
    %v78 = vunpack.c.l.b16 %v50
    %v79 = vunpack.c.l.b16 %v51
    %v80 = vunpack.c.l.b16 %v52
    %v81 = vunpack.c.l.b16 %v53
    %v82 = vunpack.c.l.b16 %v54
    %v83 = vpack.c.b16 %v76, %v75
    %v84 = vpack.c.b16 %v78, %v77
    %v85 = vpack.c.b16 %v80, %v79
    %v86 = vpack.c.b16 %v82, %v81
    %vm91 = vcmask 523264
    %v93 = vsel %vm91, %v66, 0
    %95 = vmatprep.subr.bf16.mxu0 0
    %96 = vmatpush1.bf16.msra.mxu0 %v83
    %97 = vmatprep.subr.bf16.mxu0 0
    %98 = vmatpush1.bf16.msra.mxu0 %v84
    %99 = vmatprep.subr.bf16.mxu0 0
    %100 = vmatpush1.bf16.msra.mxu0 %v85
    %101 = vmatprep.subr.bf16.mxu0 0
    %102 = vmatpush1.bf16.msra.mxu0 %v86
    %103 = vmatprep.subr.bf16.mxu0 0
    %104 = vmatpush1.bf16.msra.mxu0 0
    %105 = vmatprep.subr.bf16.mxu0 0
    %106 = vmatpush1.bf16.msra.mxu0 0
    %107 = vmatprep.subr.bf16.mxu0 0
    %108 = vmatpush1.bf16.msra.mxu0 0
    %109 = vmatprep.subr.bf16.mxu0 0
    %110 = vmatpush1.bf16.msra.mxu0 0
    %111 = vmatprep.subr.bf16.mxu0 0
    %112 = vmatpush1.bf16.msra.mxu0 0
    %113 = vmatprep.subr.bf16.mxu0 0
    %114 = vmatpush1.bf16.msra.mxu0 0
    %115 = vmatprep.subr.bf16.mxu0 0
    %116 = vmatpush1.bf16.msra.mxu0 0
    %117 = vmatprep.subr.bf16.mxu0 0
    %118 = vmatpush1.bf16.msra.mxu0 0
    %119 = vmatprep.subr.bf16.mxu0 0
    %120 = vmatpush1.bf16.msra.mxu0 0
    %121 = vmatprep.subr.bf16.mxu0 0
    %122 = vmatpush1.bf16.msra.mxu0 0
    %123 = vmatprep.subr.bf16.mxu0 0
    %124 = vmatpush1.bf16.msra.mxu0 0
    %125 = vmatprep.subr.bf16.mxu0 0
    %126 = vmatpush1.bf16.msra.mxu0 0
    %127 = vmatprep.mubr.bf16.mxu0 0
    %128 = vmatmul.mubr.bf16.gmra.mrb[0].mxu0 %v93
    %v129 = vpop.f32.mrb[0].mxu0
    %v130 = vadd.f32 %v60, %v129
    %v131 = vpop.f32.mrb[0].mxu0
    %v132 = vpop.f32.mrb[0].mxu0
    %v133 = vadd.f32 %v60, %v132
    %v134 = vpop.f32.mrb[0].mxu0
    %135 = vdwg.mxu0
    %v136 = vmax.f32 %v130, 0.0
    %v137 = vmax.f32 %v133, 0.0
    %v138 = vpack.c.bf16 %v137, %v136
    %v139 = vld [vmem:[%s4] sm:$0xf]
    %v140 = vld [vmem:[%s4 + $0x4] sm:$0xf]
    %v141 = vld [vmem:[%s4 + $0x8] sm:$0xf]
    %v142 = vld [vmem:[%s4 + $0xc] sm:$0xf]
    %v143 = vld [vmem:[%s4 + $0x10] sm:$0xf]
    %v144 = vld [vmem:[%s4 + $0x14] sm:$0xf]
    %v145 = vld [vmem:[%s4 + $0x18] sm:$0xf]
    %v146 = vld [vmem:[%s4 + $0x1c] sm:$0xf]
    %v147 = vld [vmem:[%s5] sm:$0x1]
    %v149 = vlaneseq
    %v150 = vshrl.u32 %v149, 7
    %v151 = vsub.s32 0, %v150
    %v152 = vrot.slane %v147, %v151
    %v162 = vunpack.c.l.b16 %v139
    %v163 = vunpack.c.l.b16 %v140
    %v164 = vunpack.c.l.b16 %v141
    %v165 = vunpack.c.l.b16 %v142
    %v166 = vunpack.c.l.b16 %v143
    %v167 = vunpack.c.l.b16 %v144
    %v168 = vunpack.c.l.b16 %v145
    %v169 = vunpack.c.l.b16 %v146
    %v170 = vpack.c.b16 %v163, %v162
    %v171 = vpack.c.b16 %v165, %v164
    %v172 = vpack.c.b16 %v167, %v166
    %v173 = vpack.c.b16 %v169, %v168
    %v179 = vsel %vm91, %v138, 0
    %181 = vmatprep.subr.bf16.mxu0 0
    %182 = vmatpush1.bf16.msra.mxu0 %v170
    %183 = vmatprep.subr.bf16.mxu0 0
    %184 = vmatpush1.bf16.msra.mxu0 %v171
    %185 = vmatprep.subr.bf16.mxu0 0
    %186 = vmatpush1.bf16.msra.mxu0 %v172
    %187 = vmatprep.subr.bf16.mxu0 0
    %188 = vmatpush1.bf16.msra.mxu0 %v173
    %189 = vmatprep.subr.bf16.mxu0 0
    %190 = vmatpush1.bf16.msra.mxu0 0
    %191 = vmatprep.subr.bf16.mxu0 0
    %192 = vmatpush1.bf16.msra.mxu0 0
    %193 = vmatprep.subr.bf16.mxu0 0
    %194 = vmatpush1.bf16.msra.mxu0 0
    %195 = vmatprep.subr.bf16.mxu0 0
    %196 = vmatpush1.bf16.msra.mxu0 0
    %197 = vmatprep.subr.bf16.mxu0 0
    %198 = vmatpush1.bf16.msra.mxu0 0
    %199 = vmatprep.subr.bf16.mxu0 0
    %200 = vmatpush1.bf16.msra.mxu0 0
    %201 = vmatprep.subr.bf16.mxu0 0
    %202 = vmatpush1.bf16.msra.mxu0 0
    %203 = vmatprep.subr.bf16.mxu0 0
    %204 = vmatpush1.bf16.msra.mxu0 0
    %205 = vmatprep.subr.bf16.mxu0 0
    %206 = vmatpush1.bf16.msra.mxu0 0
    %207 = vmatprep.subr.bf16.mxu0 0
    %208 = vmatpush1.bf16.msra.mxu0 0
    %209 = vmatprep.subr.bf16.mxu0 0
    %210 = vmatpush1.bf16.msra.mxu0 0
    %211 = vmatprep.subr.bf16.mxu0 0
    %212 = vmatpush1.bf16.msra.mxu0 0
    %213 = vmatprep.mubr.bf16.mxu0 0
    %214 = vmatmul.mubr.bf16.gmra.mrb[0].mxu0 %v179
    %v215 = vpop.f32.mrb[0].mxu0
    %v216 = vadd.f32 %v152, %v215
    %v217 = vpop.f32.mrb[0].mxu0
    %v218 = vpop.f32.mrb[0].mxu0
    %v219 = vadd.f32 %v152, %v218
    %v220 = vpop.f32.mrb[0].mxu0
    %221 = vdwg.mxu0
    %vm222 = vcmp.gt.f32.partialorder %v216, 20.0
    %vm223 = vcmp.gt.f32.partialorder %v219, 20.0
    %v224 = vmin.f32 %v216, 20.0
    %v225 = vmin.f32 %v219, 20.0
    %v226 = vmul.f32 %v224, 1.442695
    %v227 = vpow.pop %v226
    %v228 = vmul.f32 %v225, 1.442695
    %v229 = vpow.pop %v228
    %v230 = vadd.f32 %v227, 1.0
    %v231 = vlog2.pop %v230
    %v232 = vmul.f32 %v231, 0.6931472
    %v233 = vmul.f32 -0.5, %v227
    %v234 = vadd.f32 %v233, 1.0
    %v235 = vmul.f32 %v234, %v227
    %v236 = vand.u32 2147483647, %v227
    %vm237 = vcmp.lt.f32.partialorder %v236, 0.0004427343
    %v238 = vsel %vm237, %v235, %v232
    %v239 = vadd.f32 %v229, 1.0
    %v240 = vlog2.pop %v239
    %v241 = vmul.f32 %v240, 0.6931472
    %v242 = vmul.f32 -0.5, %v229
    %v243 = vadd.f32 %v242, 1.0
    %v244 = vmul.f32 %v243, %v229
    %v245 = vand.u32 2147483647, %v229
    %vm246 = vcmp.lt.f32.partialorder %v245, 0.0004427343
    %v247 = vsel %vm246, %v244, %v241
    %v248 = vsel %vm222, %v216, %v238
    %v249 = vsel %vm223, %v219, %v247
    %v250 = vld [vmem:[%s1] sm:$0xff]
    %v251 = vld [vmem:[%s1 + $0x8] sm:$0xff]
    %v252 = vmul.f32 %v248, %v250
    %v253 = vmul.f32 %v249, %v251
    %v254 = vpack.c.bf16 %v253, %v252
    %v255 = vld [vmem:[%s6] sm:$0xf]
    %v256 = vld [vmem:[%s6 + $0x4] sm:$0xf]
    %v257 = vld [vmem:[%s6 + $0x8] sm:$0xf]
    %v258 = vld [vmem:[%s6 + $0xc] sm:$0xf]
    %v259 = vld [vmem:[%s7] sm:$0x1]
    %v261 = vlaneseq
    %v262 = vshrl.u32 %v261, 7
    %v263 = vsub.s32 0, %v262
    %v264 = vrot.slane %v259, %v263
    %v270 = vunpack.c.l.b16 %v255
    %v271 = vunpack.c.l.b16 %v256
    %v272 = vunpack.c.l.b16 %v257
    %v273 = vunpack.c.l.b16 %v258
    %v274 = vpack.c.b16 %v271, %v270
    %v275 = vpack.c.b16 %v273, %v272
    %vm278 = vcmask 261120
    %v280 = vsel %vm278, %v254, 0
    %282 = vmatprep.subr.bf16.mxu0 0
    %283 = vmatpush1.bf16.msra.mxu0 %v274
    %284 = vmatprep.subr.bf16.mxu0 0
    %285 = vmatpush1.bf16.msra.mxu0 %v275
    %286 = vmatprep.subr.bf16.mxu0 0
    %287 = vmatpush1.bf16.msra.mxu0 0
    %288 = vmatprep.subr.bf16.mxu0 0
    %289 = vmatpush1.bf16.msra.mxu0 0
    %290 = vmatprep.subr.bf16.mxu0 0
    %291 = vmatpush1.bf16.msra.mxu0 0
    %292 = vmatprep.subr.bf16.mxu0 0
    %293 = vmatpush1.bf16.msra.mxu0 0
    %294 = vmatprep.subr.bf16.mxu0 0
    %295 = vmatpush1.bf16.msra.mxu0 0
    %296 = vmatprep.subr.bf16.mxu0 0
    %297 = vmatpush1.bf16.msra.mxu0 0
    %298 = vmatprep.subr.bf16.mxu0 0
    %299 = vmatpush1.bf16.msra.mxu0 0
    %300 = vmatprep.subr.bf16.mxu0 0
    %301 = vmatpush1.bf16.msra.mxu0 0
    %302 = vmatprep.subr.bf16.mxu0 0
    %303 = vmatpush1.bf16.msra.mxu0 0
    %304 = vmatprep.subr.bf16.mxu0 0
    %305 = vmatpush1.bf16.msra.mxu0 0
    %306 = vmatprep.subr.bf16.mxu0 0
    %307 = vmatpush1.bf16.msra.mxu0 0
    %308 = vmatprep.subr.bf16.mxu0 0
    %309 = vmatpush1.bf16.msra.mxu0 0
    %310 = vmatprep.subr.bf16.mxu0 0
    %311 = vmatpush1.bf16.msra.mxu0 0
    %312 = vmatprep.subr.bf16.mxu0 0
    %313 = vmatpush1.bf16.msra.mxu0 0
    %314 = vmatprep.mubr.bf16.mxu0 0
    %315 = vmatmul.mubr.bf16.gmra.mrb[0].mxu0 %v280
    %v316 = vpop.f32.mrb[0].mxu0
    %v317 = vadd.f32 %v264, %v316
    %v318 = vpop.f32.mrb[0].mxu0
    %v319 = vpop.f32.mrb[0].mxu0
    %v320 = vadd.f32 %v264, %v319
    %v321 = vpop.f32.mrb[0].mxu0
    %322 = vdwg.mxu0
    %323 = vst [vmem:[#allocation5] sm:$0xff] %v317
    %324 = vst [vmem:[#allocation5 + $0x8] sm:$0xff] %v320
    // Predicated region
    $region38: #{tpu_custom_call.1} parent=1 // pred_check
      _
    $region39: #{tpu_custom_call.1} parent=1 // pred_check_branch
      %326 = sbr.rel (0) target = $region41
    $region40: #{tpu_custom_call.1} parent=1 // pred_region
      %s328 = ssub.s32 256, 256
      %329 = vsyncadd [#allocation4], %s328
      %s330 = sshll.u32 [#allocation5], 4
      %s331 = int_to_ptr.vmem [resolvable:$true] %s330
      %336 = dma.vmem_to_hbm [thread:$0]  %s331, 256, %s8, [#allocation4], 128, 128, 8
    $region41: #{tpu_custom_call.1} parent=1 // pred_fallthru
      _
    // Predicated region
    $region42: #{tpu_custom_call.1} parent=1 // pred_check
      _
    $region43: #{tpu_custom_call.1} parent=1 // pred_check_branch
      %338 = sbr.rel (0) target = $region45
    $region44: #{tpu_custom_call.1} parent=1 // pred_region
      %339 = dma.done [#allocation4], 256
    $region45: #{tpu_custom_call.1} parent=1 // pred_fallthru
      _
    %340 = vsyncpa [#allocation3], 1
    %341 = vsyncpa [#allocation4], 1

</llo_original>
